<compile_context>
chip_gen: v6e
topology: v6e:2x2x1
jax: 0.10.0
libtpu: 0.0.40
codegen_flags: <defaults>
</compile_context>

<pallas_src>
import jax
import jax.numpy as jnp
from jax.experimental import pallas as pl
from jax.experimental.pallas import tpu as pltpu

_LANE = 128
_SUBLANE = 8

_TILE_SET_BYTES = 10 * 1024 * 1024   # both input tiles together (f32-conservative)
_VMEM_LIMIT_BYTES = 28 * 1024 * 1024  # ~2.5x tile-set: double-buffering + headroom


def _round_up(x: int, m: int) -> int:
    return ((x + m - 1) // m) * m


def _sq_err_acc_kernel(sel_ref, tgt_ref, acc_ref):
    # sel_ref / tgt_ref: (TILE_R, 128) blocks of gathered predictions / targets
    #                    (zero-padded past the real N*3 elements -> diff == 0).
    # acc_ref:           (8, 128) f32 output block; constant index_map across the
    #                    "arbitrary" grid axis => resident accumulator.
    @pl.when(pl.program_id(0) == 0)
    def _():
        acc_ref[...] = jnp.zeros_like(acc_ref)

    d = sel_ref[...].astype(jnp.float32) - tgt_ref[...].astype(jnp.float32)
    sq = d * d                                            # (TILE_R, 128)
    tile_r = sq.shape[0]
    # vreg-aligned regrouping of sublanes: (TILE_R,128) -> (TILE_R//8, 8, 128)
    # keeps every (8,128) slice identical to its source vreg (no data movement);
    # the axis-0 reduction is plain VALU adds onto the accumulator vreg.
    acc_ref[...] += jnp.sum(sq.reshape(tile_r // _SUBLANE, _SUBLANE, _LANE), axis=0)


def instance_mse_loss(rgb_all_instance, targets, instances):
    n, c, k = rgb_all_instance.shape
    r = n * c  # static element count of the selected set (instances assumed in [0, K))

    # ---- 1) XLA gather of the selected instance (the Kx HBM-traffic win) ----
    idx = instances.astype(jnp.int32).reshape(n, 1, 1)
    sel = jnp.take_along_axis(rgb_all_instance, idx, axis=2)[..., 0]      # [N, C]

    # ---- 2) pack predictions & targets into lane-dense (rows, 128) slabs ----
    sel_flat = sel.reshape(-1)                                            # [N*C]
    tgt_flat = targets.reshape(-1)                                        # [N*C]

    rows = max(-(-r // _LANE), 1)
    bytes_per_row = 2 * _LANE * 4                      # sel + tgt rows, f32-worst-case
    max_tile_r = max(
        _SUBLANE, (_TILE_SET_BYTES // bytes_per_row // _SUBLANE) * _SUBLANE
    )
    tile_r = min(max_tile_r, _round_up(rows, _SUBLANE))
    num_tiles = pl.cdiv(rows, tile_r)
    rows_pad = num_tiles * tile_r

    total = rows_pad * _LANE
    pad = total - r
    if pad:
        sel_flat = jnp.pad(sel_flat, (0, pad))
        tgt_flat = jnp.pad(tgt_flat, (0, pad))
    sel2d = sel_flat.reshape(rows_pad, _LANE)
    tgt2d = tgt_flat.reshape(rows_pad, _LANE)

    # ---- 3) Pallas streaming squared-error accumulation ----
    acc = pl.pallas_call(
        _sq_err_acc_kernel,
        out_shape=jax.ShapeDtypeStruct((_SUBLANE, _LANE), jnp.float32),
        grid=(num_tiles,),
        in_specs=[
            pl.BlockSpec((tile_r, _LANE), lambda i: (i, 0)),
            pl.BlockSpec((tile_r, _LANE), lambda i: (i, 0)),
        ],
        out_specs=pl.BlockSpec((_SUBLANE, _LANE), lambda i: (0, 0)),
        compiler_params=pltpu.CompilerParams(
            dimension_semantics=("arbitrary",),
            vmem_limit_bytes=_VMEM_LIMIT_BYTES,
        ),
    )(sel2d, tgt2d)

    # Tiny fused XLA epilogue: 1024-element sum + static 1/(N*3) scale.
    return jnp.sum(acc) * jnp.float32(1.0 / r)


if __name__ == "__main__":
    key = jax.random.PRNGKey(0)
    k_rgb, k_tgt, k_inst = jax.random.split(key, 3)

    N, C, K = 8, 3, 16  # batch=8, RGB channels=3, 16 candidate instances
    rgb_all_instance = jax.random.normal(k_rgb, (N, C, K), dtype=jnp.float32)
    targets = jax.random.normal(k_tgt, (N, C), dtype=jnp.float32)
    instances = jax.random.randint(k_inst, (N,), 0, K, dtype=jnp.int32)

    loss_fn = jax.jit(instance_mse_loss)
    loss = loss_fn(rgb_all_instance, targets, instances)
    jax.block_until_ready(loss)

    # pure-JAX reference of the gather + mean semantics
    sel_ref = rgb_all_instance[jnp.arange(N), :, instances]   # [N, 3]
    ref = jnp.mean((sel_ref - targets) ** 2)
    assert jnp.allclose(loss, ref, rtol=1e-5, atol=1e-6), (loss, ref)

    print("KERNEL_OK")
</pallas_src>

<mosaic_0001>
module attributes {stable_mosaic.version = 11 : i64} {
  func.func @_sq_err_acc_kernel(%arg0: i32, %arg1: memref<8x128xf32, #tpu.memory_space<vmem>>, %arg2: memref<8x128xf32, #tpu.memory_space<vmem>>, %arg3: memref<8x128xf32, #tpu.memory_space<vmem>>) attributes {dimension_semantics = [#tpu.dimension_semantics<arbitrary>], iteration_bounds = array<i64: 1>, scalar_prefetch = 0 : i64, scratch_operands = 0 : i64, tpu.core_type = #tpu.core_type<tc>, window_params = [{transform_indices = @transform_0, window_bounds = array<i64: 8, 128>}, {transform_indices = @transform_1, window_bounds = array<i64: 8, 128>}, {pipeline_mode = #tpu.pipeline_mode<synchronous>, transform_indices = @transform_2, window_bounds = array<i64: 8, 128>}]} {
    %c0_i32 = arith.constant 0 : i32
    %0 = arith.cmpi eq, %arg0, %c0_i32 : i32
    %1 = arith.extui %0 : i1 to i32
    %c0_i32_0 = arith.constant 0 : i32
    %2 = arith.cmpi ne, %1, %c0_i32_0 : i32
    scf.if %2 {
      %cst_8 = arith.constant 0.000000e+00 : f32
      %12 = vector.broadcast %cst_8 : f32 to vector<8x128xf32>
      %c0_9 = arith.constant 0 : index
      %c0_10 = arith.constant 0 : index
      %13 = vector.load %arg3[%c0_9, %c0_10] : memref<8x128xf32, #tpu.memory_space<vmem>>, vector<8x128xf32>
      tpu.vector_store %arg3[%c0_9, %c0_10], %12 {strides = array<i32>} : memref<8x128xf32, #tpu.memory_space<vmem>>, vector<8x128xf32>,
    } else {
    }
    %c0 = arith.constant 0 : index
    %c0_1 = arith.constant 0 : index
    %3 = vector.load %arg1[%c0, %c0_1] : memref<8x128xf32, #tpu.memory_space<vmem>>, vector<8x128xf32>
    %c0_2 = arith.constant 0 : index
    %c0_3 = arith.constant 0 : index
    %4 = vector.load %arg2[%c0_2, %c0_3] : memref<8x128xf32, #tpu.memory_space<vmem>>, vector<8x128xf32>
    %5 = arith.subf %3, %4 : vector<8x128xf32>
    %6 = arith.mulf %5, %5 : vector<8x128xf32>
    %c0_4 = arith.constant 0 : index
    %c0_5 = arith.constant 0 : index
    %7 = vector.load %arg3[%c0_4, %c0_5] : memref<8x128xf32, #tpu.memory_space<vmem>>, vector<8x128xf32>
    %8 = vector.shape_cast %6 : vector<8x128xf32> to vector<1x8x128xf32>
    %cst = arith.constant dense<0.000000e+00> : vector<8x128xf32>
    %9 = vector.multi_reduction <add>, %8, %cst [0] : vector<1x8x128xf32> to vector<8x128xf32>
    %10 = arith.addf %7, %9 : vector<8x128xf32>
    %c0_6 = arith.constant 0 : index
    %c0_7 = arith.constant 0 : index
    %11 = vector.load %arg3[%c0_6, %c0_7] : memref<8x128xf32, #tpu.memory_space<vmem>>, vector<8x128xf32>
    tpu.vector_store %arg3[%c0_6, %c0_7], %10 {strides = array<i32>} : memref<8x128xf32, #tpu.memory_space<vmem>>, vector<8x128xf32>,
    return
  }
  func.func @transform_0(%arg0: i32) -> (i32, i32) {
    %c0_i32 = arith.constant 0 : i32
    %c0_i32_0 = arith.constant 0 : i32
    return %arg0, %c0_i32 : i32, i32
  }
  func.func @transform_1(%arg0: i32) -> (i32, i32) {
    %c0_i32 = arith.constant 0 : i32
    %c0_i32_0 = arith.constant 0 : i32
    return %arg0, %c0_i32 : i32, i32
  }
  func.func @transform_2(%arg0: i32) -> (i32, i32) {
    %c0_i32 = arith.constant 0 : i32
    %c0_i32_0 = arith.constant 0 : i32
    %c0_i32_1 = arith.constant 0 : i32
    return %c0_i32, %c0_i32_0 : i32, i32
  }
}

</mosaic_0001>

<llo_original>
// kernel: instance_mse_loss.1
$region0: #{instance_mse_loss.1}
  #allocation0 [shape = 'u32[]', space=smem, size = 0x4, offset = 0x4, fixed_abs, tag = 'smem constant byte address 0x4 - core index']
  #allocation1 [shape = 'u32[144,128]{1,0:T(1,128)}', space=vmem, size = 0x12000, scoped, tag = 'internal scratch']
  %s0 = inlined_call_operand.vmem [shape: f32[8,128], index: 0, kind: input, shape index: {}]
  %s1 = inlined_call_operand.vmem [shape: f32[8,128], index: 1, kind: input, shape index: {}]
  %s2 = inlined_call_operand.vmem [shape: f32[8,128], index: 2, kind: output, shape index: {}]
  %s3 = sld [smem:[#allocation0]]
  $region22: #{instance_mse_loss.1} parent=0
    _
  %s5 = ssub.s32 1, %s3
  %s6 = scalar_select 0, %s5, %s3
  // Predicated region
  $region2: #{instance_mse_loss.1} parent=0 // pred_check
    _
  $region3: #{instance_mse_loss.1} parent=0 // pred_check_branch
    %8 = sbr.rel (0) target = $region5
  $region4: #{instance_mse_loss.1} parent=0 // pred_region
    _
  $region5: #{instance_mse_loss.1} parent=0 // pred_fallthru
    _
  // Predicated region
  $region6: #{instance_mse_loss.1} parent=0 // pred_check
    _
  $region7: #{instance_mse_loss.1} parent=0 // pred_check_branch
    %10 = sbr.rel (0) target = $region9
  $region8: #{instance_mse_loss.1} parent=0 // pred_region
    _
  $region9: #{instance_mse_loss.1} parent=0 // pred_fallthru
    _
  %p11 = scmp.eq.s32.totalorder 0, 0
  // Predicated region
  $region10: #{instance_mse_loss.1} parent=0 // pred_check
    %p12 = pneg %p11
  $region11: #{instance_mse_loss.1} parent=0 // pred_check_branch
    %14 = sbr.rel (%p12) target = $region13
  $region12: #{instance_mse_loss.1} parent=0 // pred_region
    %15 = vst [vmem:[%s2] sm:$0xff] 0.0
  $region13: #{instance_mse_loss.1} parent=0 // pred_fallthru
    _
  %v16 = vld [vmem:[%s0] sm:$0xff]
  %v17 = vld [vmem:[%s1] sm:$0xff]
  %v18 = vsub.f32 %v16, %v17
  %v19 = vmul.f32 %v18, %v18
  %v20 = vld [vmem:[%s2] sm:$0xff]
  %v21 = vadd.f32 %v19, 0.0
  %v22 = vadd.f32 %v20, %v21
  %23 = vst [vmem:[%s2] sm:$0xff] %v22
  // Predicated region
  $region14: #{instance_mse_loss.1} parent=0 // pred_check
    _
  $region15: #{instance_mse_loss.1} parent=0 // pred_check_branch
    %25 = sbr.rel (0) target = $region17
  $region16: #{instance_mse_loss.1} parent=0 // pred_region
    _
  $region17: #{instance_mse_loss.1} parent=0 // pred_fallthru
    _
  // Predicated region
  $region18: #{instance_mse_loss.1} parent=0 // pred_check
    _
  $region19: #{instance_mse_loss.1} parent=0 // pred_check_branch
    %27 = sbr.rel (0) target = $region21
  $region20: #{instance_mse_loss.1} parent=0 // pred_region
    _
  $region21: #{instance_mse_loss.1} parent=0 // pred_fallthru
    _

</llo_original>
